<compile_context>
chip_gen: v6e
topology: v6e:2x2x1
jax: 0.10.0
libtpu: 0.0.40
codegen_flags: <defaults>
</compile_context>

<pallas_src>
import numpy as np
import jax
import jax.numpy as jnp
from jax import lax
from jax.experimental import pallas as pl
from jax.experimental.pallas import tpu as pltpu


# ---------------------------------------------------------------------------
# Host-side constants: the 0/+1/-1 structure of the rotation matrix.
# ---------------------------------------------------------------------------
def _build_masks(D: int):
    cos_m = np.zeros((D, D), np.float32)
    sin_m = np.zeros((D, D), np.float32)
    ev = np.arange(0, D, 2)
    od = np.arange(1, D, 2)
    cos_m[ev, ev] = 1.0      # [even, even] -> +cos
    cos_m[ev, od] = 1.0      # [even, odd]  -> +cos   (module quirk, kept)
    sin_m[od, od] = 1.0      # [odd,  odd]  -> +sin
    sin_m[od, ev] = -1.0     # [odd,  even] -> -sin
    return cos_m, sin_m


# ---------------------------------------------------------------------------
# Kernels (single fused store, fully vectorized over the TS positions)
# ---------------------------------------------------------------------------
def _make_flat_kernel(ts: int, emb_dim: int):
    """Lane-dense path: output block (TS, D*D), masks (1, D*D)."""
    c0 = np.float32(-2.0 * np.log(10000.0) / emb_dim)

    def kernel(cos_mask_ref, sin_mask_ref, o_ref):
        start = pl.program_id(0) * ts
        pos = (start + lax.broadcasted_iota(jnp.int32, (ts, 1), 0)).astype(jnp.float32)
        theta = jnp.exp(c0 * (pos - 1.0))          # == 10000 ** (-2*(pos-1)/D)
        angle = pos * theta                        # (TS, 1)
        o_ref[...] = (jnp.cos(angle) * cos_mask_ref[...]
                      + jnp.sin(angle) * sin_mask_ref[...])   # single store

    return kernel


def _make_plane_kernel(ts: int, emb_dim: int):
    """Plane path: output block (TS, D, D), masks (1, D, D). Vectorized over TS."""
    c0 = np.float32(-2.0 * np.log(10000.0) / emb_dim)

    def kernel(cos_mask_ref, sin_mask_ref, o_ref):
        start = pl.program_id(0) * ts
        pos = (start + lax.broadcasted_iota(jnp.int32, (ts, 1, 1), 0)).astype(jnp.float32)
        theta = jnp.exp(c0 * (pos - 1.0))
        angle = pos * theta                        # (TS, 1, 1)
        o_ref[...] = (jnp.cos(angle) * cos_mask_ref[...]
                      + jnp.sin(angle) * sin_mask_ref[...])   # single store

    return kernel


def _padded_f32_bytes(shape):
    """VMEM footprint of an f32 buffer with (8,128) native tiling on the last 2 dims."""
    s = [int(d) for d in shape]
    s[-1] = -(-s[-1] // 128) * 128
    if len(s) >= 2:
        s[-2] = -(-s[-2] // 8) * 8
    n = 1
    for d in s:
        n *= d
    return n * 4


# ---------------------------------------------------------------------------
# Wrapper (equivalent of RotaryEmbeddings.forward)
# ---------------------------------------------------------------------------
def rotary_embeddings(x: int, embeddings_dims: int, block_size: int,
                      max_tile_bytes: int = 16 * 1024 * 1024):
    """Pallas equivalent of RotaryEmbeddings.forward(x) with x a scalar length."""
    # `x > block_size` is a Python-level (static output shape) decision,
    # exactly mirroring the PyTorch scalar comparison.
    seq_len = x if x > block_size else block_size
    D = embeddings_dims
    DD = D * D
    plane_bytes = DD * 4                     # one f32 (D, D) plane

    cos_m, sin_m = _build_masks(D)

    # Lane-dense flattened layout when D is not a multiple of 128 (masked
    # partial stores otherwise) and the flattened mask row stays small
    # (a (1, D*D) row pads 8x along sublanes in VMEM).
    use_flat = (D % 128 != 0) and (DD <= 128 * 1024)

    # Positions per grid step (TS), bounded by the per-tile VMEM budget.
    ts = max(1, max_tile_bytes // plane_bytes)
    # Keep >= 2 grid steps when there is enough work so both v7x TensorCores
    # get a share of the "parallel" axis.
    if seq_len >= 16:
        ts = min(ts, pl.cdiv(seq_len, 2))
    if ts >= seq_len:
        ts = seq_len                          # single full block, any length legal
    elif use_flat:
        ts = max(8, (ts // 8) * 8)            # 2nd-to-last dim must be a multiple of 8
    num_tiles = pl.cdiv(seq_len, ts)

    if use_flat:
        kernel = _make_flat_kernel(ts, D)
        cos_in = jnp.asarray(cos_m.reshape(1, DD))
        sin_in = jnp.asarray(sin_m.reshape(1, DD))
        out_shape = jax.ShapeDtypeStruct((seq_len, DD), jnp.float32)
        mask_block = (1, DD)
        out_block = (ts, DD)
        in_spec = pl.BlockSpec(mask_block, lambda i: (0, 0))
        out_spec = pl.BlockSpec(out_block, lambda i: (i, 0))
    else:
        kernel = _make_plane_kernel(ts, D)
        cos_in = jnp.asarray(cos_m.reshape(1, D, D))
        sin_in = jnp.asarray(sin_m.reshape(1, D, D))
        out_shape = jax.ShapeDtypeStruct((seq_len, D, D), jnp.float32)
        mask_block = (1, D, D)
        out_block = (ts, D, D)
        in_spec = pl.BlockSpec(mask_block, lambda i: (0, 0, 0))
        out_spec = pl.BlockSpec(out_block, lambda i: (i, 0, 0))

    # Padding-aware VMEM budget: double-buffered output block + 2x2 mask buffers.
    vmem_needed = 2 * _padded_f32_bytes(out_block) + 4 * _padded_f32_bytes(mask_block)
    vmem_limit = max(32 * 1024 * 1024, vmem_needed + 4 * 1024 * 1024)

    cost = pl.CostEstimate(
        flops=3 * seq_len * DD,
        transcendentals=3 * seq_len,
        bytes_accessed=seq_len * DD * 4 + 2 * DD * 4)

    out = pl.pallas_call(
        kernel,
        out_shape=out_shape,
        grid=(num_tiles,),
        in_specs=[in_spec, in_spec],
        out_specs=out_spec,
        compiler_params=pltpu.CompilerParams(
            dimension_semantics=("parallel",),
            vmem_limit_bytes=vmem_limit),
        cost_estimate=cost,
    )(cos_in, sin_in)

    if use_flat:
        out = out.reshape(seq_len, D, D)      # contiguous reshape: layout plumbing only
    return out


# ---------------------------------------------------------------------------
# Pure-numpy transcription of the PyTorch init_matrix, for verification.
# ---------------------------------------------------------------------------
def _reference(x: int, D: int, block_size: int):
    seq_len = x if x > block_size else block_size
    positions = np.arange(seq_len, dtype=np.float32)[:, None]
    theta = np.float32(10000.0) ** (-2.0 * (positions - 1.0) / np.float32(D))
    angles = (positions * theta)[:, 0]
    cos_a, sin_a = np.cos(angles), np.sin(angles)
    m = np.zeros((seq_len, D, D), np.float32)
    ev = np.arange(0, D, 2)
    od = np.arange(1, D, 2)
    m[:, ev, ev] = cos_a[:, None]
    m[:, od, od] = sin_a[:, None]
    m[:, od, ev] = -sin_a[:, None]
    m[:, ev, od] = cos_a[:, None]
    return m


if __name__ == "__main__":
    key = jax.random.PRNGKey(0)
    k1, k2 = jax.random.split(key)

    # Case 1: small non-128-multiple D -> lane-dense flat path,
    #         exercises the x > block_size branch.
    D1, bs1 = 32, 8
    x1 = int(jax.random.randint(k1, (), 9, 17))
    out1 = jax.block_until_ready(rotary_embeddings(x1, embeddings_dims=D1, block_size=bs1))
    np.testing.assert_allclose(np.asarray(out1), _reference(x1, D1, bs1),
                               rtol=1e-4, atol=1e-4)

    # Case 2: flat path with multiple tiles and a partial last tile.
    x2 = 21
    out2 = jax.block_until_ready(rotary_embeddings(x2, embeddings_dims=D1, block_size=bs1))
    np.testing.assert_allclose(np.asarray(out2), _reference(x2, D1, bs1),
                               rtol=1e-4, atol=1e-4)

    # Case 3: lane-aligned D -> vectorized plane path, 2 tiles (megacore split),
    #         partial last tile, and the x <= block_size branch.
    D3, bs3 = 128, 19
    x3 = int(jax.random.randint(k2, (), 1, 9))
    out3 = jax.block_until_ready(rotary_embeddings(x3, embeddings_dims=D3, block_size=bs3))
    np.testing.assert_allclose(np.asarray(out3), _reference(x3, D3, bs3),
                               rtol=1e-4, atol=1e-4)

    print("KERNEL_OK")
</pallas_src>

<mosaic_0001>
module attributes {stable_mosaic.version = 11 : i64} {
  func.func @kernel(%arg0: i32, %arg1: memref<1x1024xf32, #tpu.memory_space<vmem>>, %arg2: memref<1x1024xf32, #tpu.memory_space<vmem>>, %arg3: memref<8x1024xf32, #tpu.memory_space<vmem>>) attributes {dimension_semantics = [#tpu.dimension_semantics<parallel>], iteration_bounds = array<i64: 2>, scalar_prefetch = 0 : i64, scratch_operands = 0 : i64, tpu.core_type = #tpu.core_type<tc>, window_params = [{pipeline_mode = #tpu.pipeline_mode<synchronous>, transform_indices = @transform_0, window_bounds = array<i64: 1, 1024>}, {pipeline_mode = #tpu.pipeline_mode<synchronous>, transform_indices = @transform_1, window_bounds = array<i64: 1, 1024>}, {transform_indices = @transform_2, window_bounds = array<i64: 8, 1024>}]} {
    %c8_i32 = arith.constant 8 : i32
    %0 = arith.muli %arg0, %c8_i32 : i32
    %1 = tpu.iota {dimensions = array<i32: 0>} : vector<8x1xi32>
    %2 = vector.broadcast %0 : i32 to vector<8x1xi32>
    %3 = arith.addi %2, %1 : vector<8x1xi32>
    %4 = arith.sitofp %3 : vector<8x1xi32> to vector<8x1xf32>
    %cst = arith.constant 1.000000e+00 : f32
    %5 = vector.broadcast %cst : f32 to vector<8x1xf32>
    %6 = arith.subf %4, %5 : vector<8x1xf32>
    %cst_0 = arith.constant -0.575646281 : f32
    %7 = vector.broadcast %cst_0 : f32 to vector<8x1xf32>
    %8 = arith.mulf %7, %6 : vector<8x1xf32>
    %9 = math.exp %8 : vector<8x1xf32>
    %10 = arith.mulf %4, %9 : vector<8x1xf32>
    %11 = math.cos %10 : vector<8x1xf32>
    %c0 = arith.constant 0 : index
    %c0_1 = arith.constant 0 : index
    %12 = vector.load %arg1[%c0, %c0_1] : memref<1x1024xf32, #tpu.memory_space<vmem>>, vector<1x1024xf32>
    %13 = vector.broadcast %11 : vector<8x1xf32> to vector<8x1024xf32>
    %14 = vector.broadcast %12 : vector<1x1024xf32> to vector<8x1024xf32>
    %15 = arith.mulf %13, %14 : vector<8x1024xf32>
    %16 = math.sin %10 : vector<8x1xf32>
    %c0_2 = arith.constant 0 : index
    %c0_3 = arith.constant 0 : index
    %17 = vector.load %arg2[%c0_2, %c0_3] : memref<1x1024xf32, #tpu.memory_space<vmem>>, vector<1x1024xf32>
    %18 = vector.broadcast %16 : vector<8x1xf32> to vector<8x1024xf32>
    %19 = vector.broadcast %17 : vector<1x1024xf32> to vector<8x1024xf32>
    %20 = arith.mulf %18, %19 : vector<8x1024xf32>
    %21 = arith.addf %15, %20 : vector<8x1024xf32>
    %c0_4 = arith.constant 0 : index
    %c0_5 = arith.constant 0 : index
    %22 = vector.load %arg3[%c0_4, %c0_5] : memref<8x1024xf32, #tpu.memory_space<vmem>>, vector<8x1024xf32>
    tpu.vector_store %arg3[%c0_4, %c0_5], %21 {strides = array<i32>} : memref<8x1024xf32, #tpu.memory_space<vmem>>, vector<8x1024xf32>,
    return
  }
  func.func @transform_0(%arg0: i32) -> (i32, i32) {
    %c0_i32 = arith.constant 0 : i32
    %c0_i32_0 = arith.constant 0 : i32
    %c0_i32_1 = arith.constant 0 : i32
    return %c0_i32, %c0_i32_0 : i32, i32
  }
  func.func @transform_1(%arg0: i32) -> (i32, i32) {
    %c0_i32 = arith.constant 0 : i32
    %c0_i32_0 = arith.constant 0 : i32
    %c0_i32_1 = arith.constant 0 : i32
    return %c0_i32, %c0_i32_0 : i32, i32
  }
  func.func @transform_2(%arg0: i32) -> (i32, i32) {
    %c0_i32 = arith.constant 0 : i32
    %c0_i32_0 = arith.constant 0 : i32
    return %arg0, %c0_i32 : i32, i32
  }
}

</mosaic_0001>

<llo_original>
// kernel: tpu_custom_call.1
$region0: #{tpu_custom_call.1}
  #allocation0 [shape = 'u32[]', space=smem, size = 0x4, offset = 0x4, fixed_abs, tag = 'smem constant byte address 0x4 - core index']
  #allocation1 [shape = 'u32[144,128]{1,0:T(1,128)}', space=vmem, size = 0x12000, scoped, tag = 'internal scratch']
  %s0 = inlined_call_operand.hbm [shape: f32[1,1024], index: 0, kind: input, shape index: {}]
  %s1 = inlined_call_operand.hbm [shape: f32[1,1024], index: 1, kind: input, shape index: {}]
  %s2 = inlined_call_operand.hbm [shape: f32[16,1024], index: 2, kind: output, shape index: {}]
  %s3 = sld [smem:[#allocation0]]
  $region49: #{tpu_custom_call.1} parent=0
    _
  %s5 = ssub.s32 1, %s3
  %s6 = scalar_select 0, %s5, %s3
  $region1: #{tpu_custom_call.1} parent=0
    #allocation2 [shape = 'u8[4096]{0}', space=vmem, size = 0x1000, scoped, tag = 'input window, operand 0, single buffered']
    #allocation3 [shape = 's32[2]{0}', space=sflag, size = 0x8, scoped, tag = 'scoped memory for tpu_custom_call.1']
    #allocation4 [shape = 's32[2]{0}', space=sflag, size = 0x8, scoped, tag = 'scoped memory for tpu_custom_call.1']
    #allocation5 [shape = 'u8[4096]{0}', space=vmem, size = 0x1000, scoped, tag = 'input window, operand 1, single buffered']
    #allocation6 [shape = 's32[1]{0}', space=sflag, size = 0x4, scoped, tag = 'scoped memory for tpu_custom_call.1']
    #allocation7 [shape = 'u8[65536]{0}', space=vmem, size = 0x10000, scoped, tag = 'output window, operand 0']
    %7 = vsyncpa [#allocation3], 0
    %8 = vsyncpa [#allocation6], 0
    %9 = vsyncpa [#allocation4], 0
    %s10 = scalar_lea.sflag [#allocation4], 1
    %11 = vsyncpa %s10, 0
    loop: start=0, step=1, limit=4
    $region2: #{tpu_custom_call.1} parent=1 // loop_pre_header
      _
    $region3: #{tpu_custom_call.1} parent=1 // loop_header
      %s13 = sphi 0, %s17
      %p14 = scmp.ge.s32.totalorder %s13, 4
      %s21 = sphi 0, %s21
      %s23 = sphi 0, %s21
      %s24 = sphi 0, %s23
      %s38 = sphi 0, %s24
      %s42 = sphi 0, %s42
      %s44 = sphi 0, %s42
      %s45 = sphi 0, %s44
      %s59 = sphi 0, %s45
      %s65 = sphi 0, %s67
      %s68 = sphi 0, %s65
      %s69 = sphi 0, %s68
      %s85 = sphi 0, %s69
    $region4: #{tpu_custom_call.1} parent=1 // loop_header_branch
      %16 = sbr.rel (%p14) target = $region8
    $region5: #{tpu_custom_call.1} parent=1 // loop_body
      %s18 = ssub.s32 %s13, 1
      %s19 = ssub.s32 %s13, 2
      %s20 = sadd.s32 %s13, 1
      %s22 = sadd.s32 %s21, 1
      %p25 = scmp.eq.s32.totalorder %s13, 1
      %p26 = scmp.ne.s32.totalorder %s21, %s23
      %p27 = scmp.eq.s32.totalorder %s13, 0
      %p28 = por %p26, %p27
      %p29 = scmp.ne.s32.totalorder %s21, %s23
      %p30 = scmp.eq.s32.totalorder %s18, 1
      %p31 = por %p29, %p30
      %p32 = scmp.ne.s32.totalorder %s23, %s24
      %p33 = scmp.eq.s32.totalorder %s18, 0
      %p34 = por %p32, %p33
      %p35 = scmp.ne.s32.totalorder %s23, %s24
      %p36 = scmp.eq.s32.totalorder %s19, 1
      %p37 = por %p35, %p36
      %p39 = scmp.ne.s32.totalorder %s24, %s38
      %p40 = scmp.eq.s32.totalorder %s19, 0
      %p41 = por %p39, %p40
      %s43 = sadd.s32 %s42, 1
      %p46 = scmp.eq.s32.totalorder %s13, 1
      %p47 = scmp.ne.s32.totalorder %s42, %s44
      %p48 = scmp.eq.s32.totalorder %s13, 0
      %p49 = por %p47, %p48
      %p50 = scmp.ne.s32.totalorder %s42, %s44
      %p51 = scmp.eq.s32.totalorder %s18, 1
      %p52 = por %p50, %p51
      %p53 = scmp.ne.s32.totalorder %s44, %s45
      %p54 = scmp.eq.s32.totalorder %s18, 0
      %p55 = por %p53, %p54
      %p56 = scmp.ne.s32.totalorder %s44, %s45
      %p57 = scmp.eq.s32.totalorder %s19, 1
      %p58 = por %p56, %p57
      %p60 = scmp.ne.s32.totalorder %s45, %s59
      %p61 = scmp.eq.s32.totalorder %s19, 0
      %p62 = por %p60, %p61
      %s63 = ssub.s32 %s13, %s20
      %p64 = scmp.eq.s32.totalorder %s63, 0
      %s66 = sadd.s32 %s65, 1
      %s67 = scalar_select %p64, %s65, %s66
      %p70 = pneg %p64
      %p71 = scmp.eq.s32.totalorder %s13, 1
      %p72 = por %p70, %p71
      %p73 = scmp.ne.s32.totalorder %s65, %s68
      %p74 = scmp.eq.s32.totalorder %s13, 0
      %p75 = por %p73, %p74
      %p76 = scmp.ne.s32.totalorder %s65, %s68
      %p77 = scmp.eq.s32.totalorder %s18, 1
      %p78 = por %p76, %p77
      %p79 = scmp.ne.s32.totalorder %s68, %s69
      %p80 = scmp.eq.s32.totalorder %s18, 0
      %p81 = por %p79, %p80
      %p82 = scmp.ne.s32.totalorder %s68, %s69
      %p83 = scmp.eq.s32.totalorder %s19, 1
      %p84 = por %p82, %p83
      %p86 = scmp.ne.s32.totalorder %s69, %s85
      %p87 = scmp.eq.s32.totalorder %s19, 0
      %p88 = por %p86, %p87
      %p89 = scmp.le.s32.totalorder 1, %s13
      %p90 = scmp.lt.s32.totalorder %s13, 3
      %p91 = pnand %p89, %p90
      %p92 = pneg %p91
      // Predicated region
      $region9: #{tpu_custom_call.1} parent=5 // pred_check
        _
      $region10: #{tpu_custom_call.1} parent=5 // pred_check_branch
        %94 = sbr.rel (%p91) target = $region12
      $region11: #{tpu_custom_call.1} parent=5 // pred_region
        %s95 = ssub.s32 %s13, 1
        // Predicated region
        $region13: #{tpu_custom_call.1} parent=11 // pred_check
          %p96 = pneg %p34
        $region14: #{tpu_custom_call.1} parent=11 // pred_check_branch
          %98 = sbr.rel (%p96) target = $region16
        $region15: #{tpu_custom_call.1} parent=11 // pred_region
          %s100 = ssub.s32 128, 128
          %101 = vsyncadd [#allocation3], %s100
          %s103 = sshll.u32 [#allocation2], 4
          %s104 = int_to_ptr.vmem [resolvable:$true] %s103
          %106 = dma.hbm_to_vmem [thread:$0]  %s0, 128, %s104, [#allocation3]
        $region16: #{tpu_custom_call.1} parent=11 // pred_fallthru
          _
        // Predicated region
        $region17: #{tpu_custom_call.1} parent=11 // pred_check
          %p107 = pneg %p55
        $region18: #{tpu_custom_call.1} parent=11 // pred_check_branch
          %109 = sbr.rel (%p107) target = $region20
        $region19: #{tpu_custom_call.1} parent=11 // pred_region
          %s111 = ssub.s32 128, 128
          %112 = vsyncadd [#allocation6], %s111
          %s114 = sshll.u32 [#allocation5], 4
          %s115 = int_to_ptr.vmem [resolvable:$true] %s114
          %117 = dma.hbm_to_vmem [thread:$0]  %s1, 128, %s115, [#allocation6]
        $region20: #{tpu_custom_call.1} parent=11 // pred_fallthru
          _
      $region12: #{tpu_custom_call.1} parent=5 // pred_fallthru
        _
      %p118 = scmp.lt.s32.totalorder %s13, 2
      // Predicated region
      $region21: #{tpu_custom_call.1} parent=5 // pred_check
        %p119 = pneg %p118
      $region22: #{tpu_custom_call.1} parent=5 // pred_check_branch
        %121 = sbr.rel (%p119) target = $region24
      $region23: #{tpu_custom_call.1} parent=5 // pred_region
        _
      $region24: #{tpu_custom_call.1} parent=5 // pred_fallthru
        _
      %p122 = scmp.le.s32.totalorder 1, %s13
      %p123 = scmp.lt.s32.totalorder %s13, 3
      %p124 = pnand %p122, %p123
      %p125 = pneg %p124
      // Predicated region
      $region25: #{tpu_custom_call.1} parent=5 // pred_check
        _
      $region26: #{tpu_custom_call.1} parent=5 // pred_check_branch
        %127 = sbr.rel (%p124) target = $region28
      $region27: #{tpu_custom_call.1} parent=5 // pred_region
        %s128 = ssub.s32 %s13, 1
        // Predicated region
        $region29: #{tpu_custom_call.1} parent=27 // pred_check
          %p129 = pneg %p34
        $region30: #{tpu_custom_call.1} parent=27 // pred_check_branch
          %131 = sbr.rel (%p129) target = $region32
        $region31: #{tpu_custom_call.1} parent=27 // pred_region
          %132 = dma.done [#allocation3], 128
        $region32: #{tpu_custom_call.1} parent=27 // pred_fallthru
          _
        // Predicated region
        $region33: #{tpu_custom_call.1} parent=27 // pred_check
          %p133 = pneg %p55
        $region34: #{tpu_custom_call.1} parent=27 // pred_check_branch
          %135 = sbr.rel (%p133) target = $region36
        $region35: #{tpu_custom_call.1} parent=27 // pred_region
          %136 = dma.done [#allocation6], 128
        $region36: #{tpu_custom_call.1} parent=27 // pred_fallthru
          _
        %p137 = pneg %p34
        %p138 = pneg %p31
        %p139 = pneg %p55
        %p140 = pneg %p52
        %p141 = pneg %p81
        %p142 = pneg %p78
        %s143 = sand.u32 %s68, 1
        %s144 = scalar_lea.sflag [#allocation4], %s143
        %s145 = sand.u32 %s68, 1
        %s146 = smul.addr %s145, 64
        %s147 = scalar_lea.vmem [#allocation7], %s146
        %s148 = smul.u32 %s18, 8
        %v149 = vlaneseq
        %v150 = vshrl.u32 %v149, 7
        %v151 = vstv %s148
        %v152 = vadd.s32 %v151, %v150
        %v153 = vcvt.s32.f32 %v152
        %v154 = vsub.f32 %v153, 1.0
        %v155 = vmul.f32 %v154, -0.5756463
        %v156 = vmul.f32 %v155, 1.442695
        %v157 = vpow.pop %v156
        %v158 = vmul.f32 %v153, %v157
        %v159 = vand.u32 2147483647, %v158
        %vm160 = vcmp.le.f32.partialorder %v159, 0.7853982
        %vm161 = vcmp.lt.s32.totalorder %v158, 0
        %v162 = vand.u32 %v158, 2139095040
        %v163 = vshrl.u32 %v162, 23
        %v164 = vsub.s32 %v163, 127
        %v165 = vand.u32 2147483647, %v158
        %v166 = vand.u32 %v165, 8388607
        %v167 = vor.u32 %v166, 8388608
        %v168 = vsub.s32 0, %v167
        %v169 = vadd.s32 %v164, 1
        %vm170 = vcmp.gt.s32.totalorder %v169, 0
        %v171 = vsel %vm170, %v169, 0
        %v172 = vshrl.u32 %v171, 5
        %v173 = vand.u32 %v171, 31
        %v174 = vsub.s32 32, %v173
        %v175 = vshrl.u32 683565275, %v174
        %v176 = vshll.u32 683565275, %v173
        %v177 = vshrl.u32 2475754826, %v174
        %v178 = vor.u32 %v176, %v177
        %v179 = vshll.u32 2475754826, %v173
        %v180 = vshrl.u32 2131351028, %v174
        %v181 = vor.u32 %v179, %v180
        %v182 = vshll.u32 2131351028, %v173
        %v183 = vshrl.u32 2102212464, %v174
        %v184 = vor.u32 %v182, %v183
        %v185 = vshll.u32 2102212464, %v173
        %v186 = vshrl.u32 920167782, %v174
        %v187 = vor.u32 %v185, %v186
        %v188 = vshll.u32 920167782, %v173
        %v189 = vshrl.u32 1326507024, %v174
        %v190 = vor.u32 %v188, %v189
        %vm191 = vcmp.lt.s32.totalorder %v172, 1
        %vm192 = vcmp.lt.s32.totalorder %v172, 2
        %vm193 = vcmp.lt.s32.totalorder %v172, 3
        %vm194 = vcmp.lt.s32.totalorder %v172, 4
        %v195 = vsel %vm191, %v175, %v178
        %v196 = vsel %vm194, %v184, 2102212464
        %v197 = vsel %vm193, %v181, %v196
        %v198 = vsel %vm192, %v195, %v197
        %v199 = vsel %vm191, %v178, %v181
        %v200 = vsel %vm194, %v187, 920167782
        %v201 = vsel %vm193, %v184, %v200
        %v202 = vsel %vm192, %v199, %v201
        %v203 = vsel %vm191, %v181, %v184
        %v204 = vsel %vm194, %v190, 1326507024
        %v205 = vsel %vm193, %v187, %v204
        %v206 = vsel %vm192, %v203, %v205
        %v207 = vshll.u32 %v167, 8
        %v208 = vmul.u32.u64.compose %v207, %v206
        %v209 = vextract.low.u32 %v208
        %v210 = vextract.high.u32 %v208
        %v211 = vmul.u32.u64.compose %v207, %v202
        %v212 = vextract.low.u32 %v211
        %v213 = vextract.high.u32 %v211
        %v214 = vmul.u32 %v207, %v198
        %v215 = vadd.s32 %v210, %v212
        %vm216 = vc.u32 %v210, %v212
        %v217 = vadd.s32 %v213, 1
        %v218 = vsel %vm216, %v217, %v213
        %v219 = vadd.s32 %v214, %v218
        %v220 = vadd.s32 %v219, 536870912
        %v221 = vshrl.u32 %v220, 30
        %v222 = vshll.u32 %v221, 30
        %v223 = vsub.s32 %v219, %v222
        %vm224 = vcmp.lt.s32.totalorder %v223, 0
        %v225 = vsub.s32 0, %v223
        %v226 = vsel %vm224, %v225, %v223
        %v227 = vclz %v226
        %v228 = vsub.s32 %v227, 2
        %vm229 = vcmp.gt.s32.totalorder 0, %v228
        %v230 = vsel %vm229, 0, %v228
        %v231 = vsub.s32 32, %v230
        %v232 = vshll.u32 %v223, %v230
        %v233 = vshrl.u32 %v215, %v231
        %v234 = vor.u32 %v232, %v233
        %v235 = vsub.s32 4294967266, %v230
        %v236 = vadd.s32 %v235, 127
        %v237 = vshll.u32 %v236, 23
        %v238 = vor.u32 4788187, %v237
        %v239 = vand.u32 2147483647, %v238
        %v241 = vcvt.s32.f32 %v234
        %v242 = vmul.f32 %v241, %v239
        %v243 = vxor.u32 %v242, 2147483648
        %v244 = vsel %vm161, %v243, %v242
        %v245 = vsub.s32 4, %v221
        %v246 = vsel %vm161, %v245, %v221
        %v247 = vsel %vm160, %v158, %v244
        %v248 = vsel %vm160, 0, %v246
        %v249 = vcosq.f32.pop %v247
        %v250 = vsinq.f32.pop %v247
        %vm251 = vweird.f32 %v158
        %v252 = vand.u32 %v248, 3
        %vm253 = vcmp.lt.s32.totalorder %v252, 2
        %vm254 = vcmp.eq.s32.totalorder %v252, 0
        %v255 = vxor.u32 %v250, 2147483648
        %v256 = vsel %vm254, %v249, %v255
        %vm257 = vcmp.eq.s32.totalorder %v252, 2
        %v258 = vxor.u32 %v249, 2147483648
        %v259 = vsel %vm257, %v258, %v250
        %v260 = vsel %vm253, %v256, %v259
        %v261 = vsel %vm251, nan, %v260
        %v262 = vld [vmem:[#allocation2] sm:$0xff]
        %v264 = vlaneseq
        %v265 = vshrl.u32 %v264, 7
        %v266 = vsub.s32 0, %v265
        %v267 = vrot.slane %v262, %v266
        %v268 = vlaneseq
        %v269 = vshrl.u32 %v268, 7
        %v270 = vsub.s32 1, %v269
        %v271 = vrot.slane %v262, %v270
        %v272 = vlaneseq
        %v273 = vshrl.u32 %v272, 7
        %v274 = vsub.s32 2, %v273
        %v275 = vrot.slane %v262, %v274
        %v276 = vlaneseq
        %v277 = vshrl.u32 %v276, 7
        %v278 = vsub.s32 3, %v277
        %v279 = vrot.slane %v262, %v278
        %v280 = vlaneseq
        %v281 = vshrl.u32 %v280, 7
        %v282 = vsub.s32 4, %v281
        %v283 = vrot.slane %v262, %v282
        %v284 = vlaneseq
        %v285 = vshrl.u32 %v284, 7
        %v286 = vsub.s32 5, %v285
        %v287 = vrot.slane %v262, %v286
        %v288 = vlaneseq
        %v289 = vshrl.u32 %v288, 7
        %v290 = vsub.s32 6, %v289
        %v291 = vrot.slane %v262, %v290
        %v292 = vlaneseq
        %v293 = vshrl.u32 %v292, 7
        %v294 = vsub.s32 7, %v293
        %v295 = vrot.slane %v262, %v294
        %v304 = vmul.f32 %v261, %v267
        %v305 = vmul.f32 %v261, %v271
        %v306 = vmul.f32 %v261, %v275
        %v307 = vmul.f32 %v261, %v279
        %v308 = vmul.f32 %v261, %v283
        %v309 = vmul.f32 %v261, %v287
        %v310 = vmul.f32 %v261, %v291
        %v311 = vmul.f32 %v261, %v295
        %v312 = vand.u32 2147483647, %v158
        %vm313 = vcmp.le.f32.partialorder %v312, 0.7853982
        %vm314 = vcmp.lt.s32.totalorder %v158, 0
        %v315 = vand.u32 %v158, 2139095040
        %v316 = vshrl.u32 %v315, 23
        %v317 = vsub.s32 %v316, 127
        %v318 = vand.u32 2147483647, %v158
        %v319 = vand.u32 %v318, 8388607
        %v320 = vor.u32 %v319, 8388608
        %v321 = vsub.s32 0, %v320
        %v322 = vadd.s32 %v317, 1
        %vm323 = vcmp.gt.s32.totalorder %v322, 0
        %v324 = vsel %vm323, %v322, 0
        %v325 = vshrl.u32 %v324, 5
        %v326 = vand.u32 %v324, 31
        %v327 = vsub.s32 32, %v326
        %v328 = vshrl.u32 683565275, %v327
        %v329 = vshll.u32 683565275, %v326
        %v330 = vshrl.u32 2475754826, %v327
        %v331 = vor.u32 %v329, %v330
        %v332 = vshll.u32 2475754826, %v326
        %v333 = vshrl.u32 2131351028, %v327
        %v334 = vor.u32 %v332, %v333
        %v335 = vshll.u32 2131351028, %v326
        %v336 = vshrl.u32 2102212464, %v327
        %v337 = vor.u32 %v335, %v336
        %v338 = vshll.u32 2102212464, %v326
        %v339 = vshrl.u32 920167782, %v327
        %v340 = vor.u32 %v338, %v339
        %v341 = vshll.u32 920167782, %v326
        %v342 = vshrl.u32 1326507024, %v327
        %v343 = vor.u32 %v341, %v342
        %vm344 = vcmp.lt.s32.totalorder %v325, 1
        %vm345 = vcmp.lt.s32.totalorder %v325, 2
        %vm346 = vcmp.lt.s32.totalorder %v325, 3
        %vm347 = vcmp.lt.s32.totalorder %v325, 4
        %v348 = vsel %vm344, %v328, %v331
        %v349 = vsel %vm347, %v337, 2102212464
        %v350 = vsel %vm346, %v334, %v349
        %v351 = vsel %vm345, %v348, %v350
        %v352 = vsel %vm344, %v331, %v334
        %v353 = vsel %vm347, %v340, 920167782
        %v354 = vsel %vm346, %v337, %v353
        %v355 = vsel %vm345, %v352, %v354
        %v356 = vsel %vm344, %v334, %v337
        %v357 = vsel %vm347, %v343, 1326507024
        %v358 = vsel %vm346, %v340, %v357
        %v359 = vsel %vm345, %v356, %v358
        %v360 = vshll.u32 %v320, 8
        %v361 = vmul.u32.u64.compose %v360, %v359
        %v362 = vextract.low.u32 %v361
        %v363 = vextract.high.u32 %v361
        %v364 = vmul.u32.u64.compose %v360, %v355
        %v365 = vextract.low.u32 %v364
        %v366 = vextract.high.u32 %v364
        %v367 = vmul.u32 %v360, %v351
        %v368 = vadd.s32 %v363, %v365
        %vm369 = vc.u32 %v363, %v365
        %v370 = vadd.s32 %v366, 1
        %v371 = vsel %vm369, %v370, %v366
        %v372 = vadd.s32 %v367, %v371
        %v373 = vadd.s32 %v372, 536870912
        %v374 = vshrl.u32 %v373, 30
        %v375 = vshll.u32 %v374, 30
        %v376 = vsub.s32 %v372, %v375
        %vm377 = vcmp.lt.s32.totalorder %v376, 0
        %v378 = vsub.s32 0, %v376
        %v379 = vsel %vm377, %v378, %v376
        %v380 = vclz %v379
        %v381 = vsub.s32 %v380, 2
        %vm382 = vcmp.gt.s32.totalorder 0, %v381
        %v383 = vsel %vm382, 0, %v381
        %v384 = vsub.s32 32, %v383
        %v385 = vshll.u32 %v376, %v383
        %v386 = vshrl.u32 %v368, %v384
        %v387 = vor.u32 %v385, %v386
        %v388 = vsub.s32 4294967266, %v383
        %v389 = vadd.s32 %v388, 127
        %v390 = vshll.u32 %v389, 23
        %v391 = vor.u32 4788187, %v390
        %v392 = vand.u32 2147483647, %v391
        %v394 = vcvt.s32.f32 %v387
        %v395 = vmul.f32 %v394, %v392
        %v396 = vxor.u32 %v395, 2147483648
        %v397 = vsel %vm314, %v396, %v395
        %v398 = vsub.s32 4, %v374
        %v399 = vsel %vm314, %v398, %v374
        %v400 = vsel %vm313, %v158, %v397
        %v401 = vsel %vm313, 0, %v399
        %v402 = vcosq.f32.pop %v400
        %v403 = vsinq.f32.pop %v400
        %vm404 = vweird.f32 %v158
        %v405 = vadd.s32 %v401, 3
        %v406 = vand.u32 %v405, 3
        %vm407 = vcmp.lt.s32.totalorder %v406, 2
        %vm408 = vcmp.eq.s32.totalorder %v406, 0
        %v409 = vxor.u32 %v403, 2147483648
        %v410 = vsel %vm408, %v402, %v409
        %vm411 = vcmp.eq.s32.totalorder %v406, 2
        %v412 = vxor.u32 %v402, 2147483648
        %v413 = vsel %vm411, %v412, %v403
        %v414 = vsel %vm407, %v410, %v413
        %v415 = vsel %vm404, nan, %v414
        %v416 = vld [vmem:[#allocation5] sm:$0xff]
        %v418 = vlaneseq
        %v419 = vshrl.u32 %v418, 7
        %v420 = vsub.s32 0, %v419
        %v421 = vrot.slane %v416, %v420
        %v422 = vlaneseq
        %v423 = vshrl.u32 %v422, 7
        %v424 = vsub.s32 1, %v423
        %v425 = vrot.slane %v416, %v424
        %v426 = vlaneseq
        %v427 = vshrl.u32 %v426, 7
        %v428 = vsub.s32 2, %v427
        %v429 = vrot.slane %v416, %v428
        %v430 = vlaneseq
        %v431 = vshrl.u32 %v430, 7
        %v432 = vsub.s32 3, %v431
        %v433 = vrot.slane %v416, %v432
        %v434 = vlaneseq
        %v435 = vshrl.u32 %v434, 7
        %v436 = vsub.s32 4, %v435
        %v437 = vrot.slane %v416, %v436
        %v438 = vlaneseq
        %v439 = vshrl.u32 %v438, 7
        %v440 = vsub.s32 5, %v439
        %v441 = vrot.slane %v416, %v440
        %v442 = vlaneseq
        %v443 = vshrl.u32 %v442, 7
        %v444 = vsub.s32 6, %v443
        %v445 = vrot.slane %v416, %v444
        %v446 = vlaneseq
        %v447 = vshrl.u32 %v446, 7
        %v448 = vsub.s32 7, %v447
        %v449 = vrot.slane %v416, %v448
        %v458 = vmul.f32 %v415, %v421
        %v459 = vmul.f32 %v415, %v425
        %v460 = vmul.f32 %v415, %v429
        %v461 = vmul.f32 %v415, %v433
        %v462 = vmul.f32 %v415, %v437
        %v463 = vmul.f32 %v415, %v441
        %v464 = vmul.f32 %v415, %v445
        %v465 = vmul.f32 %v415, %v449
        %v466 = vadd.f32 %v304, %v458
        %v467 = vadd.f32 %v305, %v459
        %v468 = vadd.f32 %v306, %v460
        %v469 = vadd.f32 %v307, %v461
        %v470 = vadd.f32 %v308, %v462
        %v471 = vadd.f32 %v309, %v463
        %v472 = vadd.f32 %v310, %v464
        %v473 = vadd.f32 %v311, %v465
        %474 = vst [vmem:[%s147] sm:$0xff] %v466
        %475 = vst [vmem:[%s147 + $0x8] sm:$0xff] %v467
        %476 = vst [vmem:[%s147 + $0x10] sm:$0xff] %v468
        %477 = vst [vmem:[%s147 + $0x18] sm:$0xff] %v469
        %478 = vst [vmem:[%s147 + $0x20] sm:$0xff] %v470
        %479 = vst [vmem:[%s147 + $0x28] sm:$0xff] %v471
        %480 = vst [vmem:[%s147 + $0x30] sm:$0xff] %v472
        %481 = vst [vmem:[%s147 + $0x38] sm:$0xff] %v473
        %s482 = sand.u32 %s68, 1
        %s483 = scalar_lea.sflag [#allocation4], %s482
        %s484 = sand.u32 %s68, 1
        %s485 = smul.addr %s484, 64
        %s486 = scalar_lea.vmem [#allocation7], %s485
        // Predicated region
        $region37: #{tpu_custom_call.1} parent=27 // pred_check
          %p487 = pneg %p78
        $region38: #{tpu_custom_call.1} parent=27 // pred_check_branch
          %489 = sbr.rel (%p487) target = $region40
        $region39: #{tpu_custom_call.1} parent=27 // pred_region
          %s491 = ssub.s32 1024, 1024
          %492 = vsyncadd %s483, %s491
          %s493 = smul.addr %s18, 8
          %s494 = smul.addr %s493, 128
          %s495 = scalar_lea.hbm %s2, %s494
          %s497 = sshll.u32 %s486, 4
          %s498 = int_to_ptr.vmem [resolvable:$true] %s497
          %500 = dma.vmem_to_hbm [thread:$0]  %s498, 1024, %s495, %s483
        $region40: #{tpu_custom_call.1} parent=27 // pred_fallthru
          _
      $region28: #{tpu_custom_call.1} parent=5 // pred_fallthru
        _
      %p501 = scmp.le.s32.totalorder 2, %s13
      // Predicated region
      $region41: #{tpu_custom_call.1} parent=5 // pred_check
        %p502 = pneg %p501
      $region42: #{tpu_custom_call.1} parent=5 // pred_check_branch
        %504 = sbr.rel (%p502) target = $region44
      $region43: #{tpu_custom_call.1} parent=5 // pred_region
        %s505 = ssub.s32 %s13, 2
        // Predicated region
        $region45: #{tpu_custom_call.1} parent=43 // pred_check
          %p506 = pneg %p84
        $region46: #{tpu_custom_call.1} parent=43 // pred_check_branch
          %508 = sbr.rel (%p506) target = $region48
        $region47: #{tpu_custom_call.1} parent=43 // pred_region
          %s509 = sand.u32 %s69, 1
          %s510 = scalar_lea.sflag [#allocation4], %s509
          %s511 = sand.u32 %s69, 1
          %s512 = smul.addr %s511, 64
          %s513 = scalar_lea.vmem [#allocation7], %s512
          %514 = dma.done %s510, 1024
        $region48: #{tpu_custom_call.1} parent=43 // pred_fallthru
          _
      $region44: #{tpu_custom_call.1} parent=5 // pred_fallthru
        _
    $region6: #{tpu_custom_call.1} parent=1 // loop_footer
      %s17 = sadd.s32 1, %s13
    $region7: #{tpu_custom_call.1} parent=1 // loop_footer_branch
      %12 = sbr.rel target = $region3
    $region8: #{tpu_custom_call.1} parent=1 // loop_exit
      _
    %515 = vsyncpa [#allocation3], 1
    %s516 = scalar_lea.sflag [#allocation3], 1
    %517 = vsyncpa %s516, 1
    %518 = vsyncpa [#allocation6], 1
    %519 = vsyncpa [#allocation4], 1
    %s520 = scalar_lea.sflag [#allocation4], 1
    %521 = vsyncpa %s520, 1

</llo_original>
